<compile_context>
chip_gen: v7x
topology: tpu7x:2x2x1
jax: 0.10.0
libtpu: 0.0.40
codegen_flags: <defaults>
</compile_context>

<pallas_src>
import jax
import jax.numpy as jnp
from jax.experimental import pallas as pl
from jax.experimental.pallas import tpu as pltpu

POOL_K = 8     # AvgPool1d kernel_size
POOL_S = 4     # AvgPool1d stride
_ROW_PAD = 16  # per-batch packed-row alignment (bf16 sublane pack; also 8-aligned)


def _round_up(n, m):
    return (n + m - 1) // m * m


def _largest_divisor_leq(n, cap):
    cap = max(1, min(n, cap))
    for d in range(cap, 0, -1):
        if n % d == 0:
            return d
    return 1


# ----------------------------------------------------------------------------
# Pallas kernel: AvgPool1d(8, 4) over time (pool-first) fused with Linear.
# ----------------------------------------------------------------------------
def _semantic_linear_pool_kernel(x_ref, w_ref, b_ref, o_ref, p_ref):
    # x_ref: (tm, 4*C_in) bf16 — row r packs 4 consecutive frames of one batch.
    # w_ref: (C_in, tn)   bf16
    # b_ref: (1, tn)      f32
    # o_ref: (tm, tn)     f32  — row j of a batch is pooled frame j; rows
    #                     j >= T_out are seam/pad rows dropped by the wrapper.
    # p_ref: (tm, C_in)   bf16 VMEM scratch — pooled activations, cached across
    #                     output-channel (j) tiles.
    c_in = w_ref.shape[0]

    @pl.when(pl.program_id(1) == 0)
    def _():
        x = x_ref[...].astype(jnp.float32)                   # (tm, 4*C_in) f32
        # Group-of-4 time sum: lane-aligned contiguous slices + VPU adds (f32).
        g = (x[:, 0 * c_in:1 * c_in]
             + x[:, 1 * c_in:2 * c_in]
             + x[:, 2 * c_in:3 * c_in]
             + x[:, 3 * c_in:4 * c_in])                       # (tm, C_in)
        # AvgPool window (kernel=8, stride=4) == mean of two adjacent groups.
        # roll by tm-1 == roll by -1: row i picks up group i+1 via the XLU.
        # The cyclic wrap only contaminates a dropped seam/pad row (tm % T4p == 0).
        g_next = pltpu.roll(g, shift=g.shape[0] - 1, axis=0)
        p_ref[...] = ((g + g_next) * 0.125).astype(jnp.bfloat16)

    # MXU matmul: bf16 inputs, f32 accumulate.
    h = jnp.dot(p_ref[...], w_ref[...], preferred_element_type=jnp.float32)
    o_ref[...] = (h + b_ref[...]).astype(o_ref.dtype)


def semantic_linear_pool(x, w, b, *, m_tile=1024, n_tile=512):
    """Pallas equivalent of Semantic_linear_pool.forward.

    x: (B, T, C_in)  float32
    w: (C_in, C_out) float32  (transposed vs. torch Linear.weight)
    b: (C_out,)      float32
    returns: (B, T_out, C_out) float32 with T_out = (T - 8)//4 + 1
    """
    B, T, C_in = x.shape
    C_out = w.shape[1]
    assert T >= POOL_K, "AvgPool1d(kernel=8) needs T >= 8"

    T_out = (T - POOL_K) // POOL_S + 1
    T4 = T_out + 1                    # groups of 4 frames actually needed per batch
    T4p = _round_up(T4, _ROW_PAD)     # pad per-batch rows so tiles stay sublane-dense
    T_pack = POOL_S * T4p             # frames packed per batch (tail zero-padded)
    R = B * T4p                       # matmul M dimension (batch folded into M)

    # Pack 4 consecutive frames per row, zero-pad the per-batch tail, and cast
    # to bf16 at the boundary (halves the dominant DMA stream into the kernel).
    x_used = x[:, :min(T, T_pack), :]
    pad = T_pack - x_used.shape[1]
    if pad:
        x_used = jnp.pad(x_used, ((0, 0), (0, pad), (0, 0)))
    x_r = x_used.reshape(R, POOL_S * C_in).astype(jnp.bfloat16)

    w_bf = w.astype(jnp.bfloat16)                  # bf16 MXU weights at the boundary
    b2 = b.reshape(1, C_out).astype(jnp.float32)   # bias stays f32

    # Output-channel tile (multiples of 128; 256+ keeps the v6e/v7x MXU busy).
    tn = C_out if C_out <= n_tile else n_tile
    assert tn == C_out or tn % 128 == 0

    # Row tile: whole padded batches only, so the in-kernel roll never pairs a
    # real output row with data from another batch or another tile.
    bpt = _largest_divisor_leq(B, max(1, m_tile // T4p))
    tm = bpt * T4p
    assert tm % T4p == 0 and R % tm == 0
    grid = (R // tm, pl.cdiv(C_out, tn))

    # VMEM budget for the chosen tiles (double-buffered in/out + pooled scratch).
    x_blk = tm * POOL_S * C_in * 2
    w_blk = C_in * tn * 2
    b_blk = tn * 4
    o_blk = tm * tn * 4
    p_blk = tm * C_in * 2
    vmem_need = 2 * (x_blk + w_blk + b_blk + o_blk) + p_blk
    vmem_limit = min(max(int(vmem_need * 1.5), 32 * 1024 * 1024),
                     64 * 1024 * 1024)

    cost = pl.CostEstimate(
        flops=2 * R * C_in * C_out + 6 * R * C_in,
        transcendentals=0,
        bytes_accessed=(R * POOL_S * C_in * 2      # x (bf16)
                        + C_in * C_out * 2         # w (bf16)
                        + C_out * 4                # bias
                        + R * C_out * 4),          # output (f32)
    )

    out = pl.pallas_call(
        _semantic_linear_pool_kernel,
        out_shape=jax.ShapeDtypeStruct((R, C_out), jnp.float32),
        grid=grid,
        in_specs=[
            pl.BlockSpec((tm, POOL_S * C_in), lambda i, j: (i, 0)),
            pl.BlockSpec((C_in, tn), lambda i, j: (0, j)),
            pl.BlockSpec((1, tn), lambda i, j: (0, j)),
        ],
        out_specs=pl.BlockSpec((tm, tn), lambda i, j: (i, j)),
        scratch_shapes=[pltpu.VMEM((tm, C_in), jnp.bfloat16)],
        compiler_params=pltpu.CompilerParams(
            dimension_semantics=("parallel", "arbitrary"),
            vmem_limit_bytes=vmem_limit,
        ),
        cost_estimate=cost,
    )(x_r, w_bf, b2)

    # Drop the per-batch seam/pad rows (free slice).
    return out.reshape(B, T4p, C_out)[:, :T_out, :]


def semantic_linear_pool_ref(x, w, b):
    """Pure-JAX reference mirroring the PyTorch module exactly (linear, then pool)."""
    h = jnp.einsum("btc,cd->btd", x, w) + b        # nn.Linear
    T = h.shape[1]
    T_out = (T - POOL_K) // POOL_S + 1
    return jnp.stack(
        [h[:, j * POOL_S:j * POOL_S + POOL_K, :].mean(axis=1) for j in range(T_out)],
        axis=1,
    )


# ----------------------------------------------------------------------------
# MimiCodec (Pallas): only the provided sub-module is implemented.
# ----------------------------------------------------------------------------
class MimiCodecPallas:
    def __init__(self, semantic_feature_dim=128, latent_dim=128, key=None):
        if key is None:
            key = jax.random.PRNGKey(0)
        kw, kb = jax.random.split(key)
        bound = 1.0 / (semantic_feature_dim ** 0.5)  # nn.Linear default init
        self.w = jax.random.uniform(
            kw, (semantic_feature_dim, latent_dim), jnp.float32, -bound, bound)
        self.b = jax.random.uniform(
            kb, (latent_dim,), jnp.float32, -bound, bound)
        # TODO(synk): SEANetEncoder / SEANetDecoder source not provided in the reference module.
        # TODO(synk): ProjectedTransformer (encoder/decoder transformers) source not provided.
        # TODO(synk): ConvDownsample1d / ConvTrUpsample1d source not provided.
        # TODO(synk): SplitResidualVectorQuantizer source not provided.

    def semantic_mapping(self, semantic_features):
        return semantic_linear_pool(semantic_features, self.w, self.b)

    def forward(self, audio_data, semantic_features):
        # Only the semantic-mapping branch is reproducible from the given source.
        return self.semantic_mapping(semantic_features)


if __name__ == "__main__":
    key = jax.random.PRNGKey(0)
    k_audio, k_sem, k_params = jax.random.split(key, 3)

    B = 2
    T = 16           # semantic-feature frames
    SEM_DIM = 128    # scaled-down semantic_feature_dim (1024 in full model)
    LATENT = 128     # scaled-down latent_dim (512 in full model)
    AUDIO_LEN = 1920

    audio_data = jax.random.normal(k_audio, (B, 1, AUDIO_LEN), jnp.float32)
    semantic_features = jax.random.normal(k_sem, (B, T, SEM_DIM), jnp.float32)

    model = MimiCodecPallas(semantic_feature_dim=SEM_DIM, latent_dim=LATENT,
                            key=k_params)

    out = model.forward(audio_data, semantic_features)
    out = jax.block_until_ready(out)

    ref = semantic_linear_pool_ref(semantic_features, model.w, model.b)
    T_out = (T - POOL_K) // POOL_S + 1
    assert out.shape == (B, T_out, LATENT), out.shape
    # bf16 activations/weights on the MXU (f32 accumulate) + pool/linear
    # reorder -> small fp noise vs the pure-f32 reference.
    err = float(jnp.max(jnp.abs(out - ref)))
    assert jnp.allclose(out, ref, atol=1e-2, rtol=1e-2), (
        "mismatch vs reference, max abs diff = %e" % err)

    print("KERNEL_OK")
</pallas_src>

<mosaic_0001>
module attributes {stable_mosaic.version = 11 : i64} {
  func.func @_semantic_linear_pool_kernel(%arg0: i32, %arg1: i32, %arg2: memref<32x512xbf16, #tpu.memory_space<vmem>>, %arg3: memref<128x128xbf16, #tpu.memory_space<vmem>>, %arg4: memref<1x128xf32, #tpu.memory_space<vmem>>, %arg5: memref<32x128xf32, #tpu.memory_space<vmem>>, %arg6: memref<32x128xbf16, #tpu.memory_space<vmem>>) attributes {dimension_semantics = [#tpu.dimension_semantics<parallel>, #tpu.dimension_semantics<arbitrary>], iteration_bounds = array<i64: 1, 1>, scalar_prefetch = 0 : i64, scratch_operands = 1 : i64, tpu.core_type = #tpu.core_type<tc>, window_params = [{transform_indices = @transform_0, window_bounds = array<i64: 32, 512>}, {transform_indices = @transform_1, window_bounds = array<i64: 128, 128>}, {transform_indices = @transform_2, window_bounds = array<i64: 1, 128>}, {transform_indices = @transform_3, window_bounds = array<i64: 32, 128>}]} {
    %c0_i32 = arith.constant 0 : i32
    %0 = arith.cmpi eq, %arg1, %c0_i32 : i32
    %1 = arith.extui %0 : i1 to i32
    %c0_i32_0 = arith.constant 0 : i32
    %2 = arith.cmpi ne, %1, %c0_i32_0 : i32
    scf.if %2 {
      %c0_8 = arith.constant 0 : index
      %c0_9 = arith.constant 0 : index
      %10 = vector.load %arg2[%c0_8, %c0_9] : memref<32x512xbf16, #tpu.memory_space<vmem>>, vector<32x512xbf16>
      %11 = arith.extf %10 : vector<32x512xbf16> to vector<32x512xf32>
      %12 = vector.extract_strided_slice %11 {offsets = [0, 0], sizes = [32, 128], strides = [1, 1]} : vector<32x512xf32> to vector<32x128xf32>
      %13 = vector.extract_strided_slice %11 {offsets = [0, 128], sizes = [32, 128], strides = [1, 1]} : vector<32x512xf32> to vector<32x128xf32>
      %14 = arith.addf %12, %13 : vector<32x128xf32>
      %15 = vector.extract_strided_slice %11 {offsets = [0, 256], sizes = [32, 128], strides = [1, 1]} : vector<32x512xf32> to vector<32x128xf32>
      %16 = arith.addf %14, %15 : vector<32x128xf32>
      %17 = vector.extract_strided_slice %11 {offsets = [0, 384], sizes = [32, 128], strides = [1, 1]} : vector<32x512xf32> to vector<32x128xf32>
      %18 = arith.addf %16, %17 : vector<32x128xf32>
      %c31_i32 = arith.constant 31 : i32
      %19 = tpu.dynamic_rotate %18 by %c31_i32 dim 0 : vector<32x128xf32>, i32 -> vector<32x128xf32>
      %20 = arith.addf %18, %19 : vector<32x128xf32>
      %cst_10 = arith.constant 1.250000e-01 : f32
      %21 = vector.broadcast %cst_10 : f32 to vector<32x128xf32>
      %22 = arith.mulf %20, %21 : vector<32x128xf32>
      %23 = arith.truncf %22 : vector<32x128xf32> to vector<32x128xbf16>
      %c0_11 = arith.constant 0 : index
      %c0_12 = arith.constant 0 : index
      %24 = vector.load %arg6[%c0_11, %c0_12] : memref<32x128xbf16, #tpu.memory_space<vmem>>, vector<32x128xbf16>
      tpu.vector_store %arg6[%c0_11, %c0_12], %23 {strides = array<i32>} : memref<32x128xbf16, #tpu.memory_space<vmem>>, vector<32x128xbf16>,
    } else {
    }
    %c0 = arith.constant 0 : index
    %c0_1 = arith.constant 0 : index
    %3 = vector.load %arg6[%c0, %c0_1] : memref<32x128xbf16, #tpu.memory_space<vmem>>, vector<32x128xbf16>
    %c0_2 = arith.constant 0 : index
    %c0_3 = arith.constant 0 : index
    %4 = vector.load %arg3[%c0_2, %c0_3] : memref<128x128xbf16, #tpu.memory_space<vmem>>, vector<128x128xbf16>
    %cst = arith.constant dense<0.000000e+00> : vector<32x128xf32>
    %5 = tpu.matmul %3, %4, %cst {dimension_numbers = #tpu.dot_dimension_numbers<[1], [0], [0], [1], [0, 0, 1, 1], [], []>} : vector<32x128xbf16>, vector<128x128xbf16>, vector<32x128xf32> -> vector<32x128xf32>
    %c0_4 = arith.constant 0 : index
    %c0_5 = arith.constant 0 : index
    %6 = vector.load %arg4[%c0_4, %c0_5] : memref<1x128xf32, #tpu.memory_space<vmem>>, vector<1x128xf32>
    %7 = vector.broadcast %6 : vector<1x128xf32> to vector<32x128xf32>
    %8 = arith.addf %5, %7 : vector<32x128xf32>
    %c0_6 = arith.constant 0 : index
    %c0_7 = arith.constant 0 : index
    %9 = vector.load %arg5[%c0_6, %c0_7] : memref<32x128xf32, #tpu.memory_space<vmem>>, vector<32x128xf32>
    tpu.vector_store %arg5[%c0_6, %c0_7], %8 {strides = array<i32>} : memref<32x128xf32, #tpu.memory_space<vmem>>, vector<32x128xf32>,
    return
  }
  func.func @transform_0(%arg0: i32, %arg1: i32) -> (i32, i32) {
    %c0_i32 = arith.constant 0 : i32
    %c0_i32_0 = arith.constant 0 : i32
    return %arg0, %c0_i32 : i32, i32
  }
  func.func @transform_1(%arg0: i32, %arg1: i32) -> (i32, i32) {
    %c0_i32 = arith.constant 0 : i32
    %c0_i32_0 = arith.constant 0 : i32
    return %c0_i32, %arg1 : i32, i32
  }
  func.func @transform_2(%arg0: i32, %arg1: i32) -> (i32, i32) {
    %c0_i32 = arith.constant 0 : i32
    %c0_i32_0 = arith.constant 0 : i32
    return %c0_i32, %arg1 : i32, i32
  }
  func.func @transform_3(%arg0: i32, %arg1: i32) -> (i32, i32) {
    %c0_i32 = arith.constant 0 : i32
    return %arg0, %arg1 : i32, i32
  }
}

</mosaic_0001>

<llo_original>
// kernel: tpu_custom_call.1
$region0: #{tpu_custom_call.1}
  #allocation0 [shape = 'u32[]', space=smem, size = 0x4, offset = 0x4, fixed_abs, tag = 'smem constant byte address 0x4 - core index']
  #allocation1 [shape = 'u32[144,128]{1,0:T(1,128)}', space=vmem, size = 0x12000, scoped, tag = 'internal scratch']
  #allocation2 [shape = 'bf16[32,128]{1,0:T(16,128)(2,1)}', space=vmem, size = 0x2000, scoped, tag = 'scratch operand']
  %s0 = inlined_call_operand.hbm [shape: bf16[32,512], index: 0, kind: input, shape index: {}]
  %s1 = inlined_call_operand.hbm [shape: bf16[128,128], index: 1, kind: input, shape index: {}]
  %s2 = inlined_call_operand.vmem [shape: f32[1,128], index: 2, kind: input, shape index: {}]
  %s3 = inlined_call_operand.hbm [shape: f32[32,128], index: 3, kind: output, shape index: {}]
  %s4 = sld [smem:[#allocation0]]
  $region34: #{tpu_custom_call.1} parent=0
    _
  %s6 = ssub.s32 1, %s4
  %s7 = scalar_select 0, %s6, %s4
  $region1: #{tpu_custom_call.1} parent=0
    #allocation3 [shape = 'u8[32768]{0}', space=vmem, size = 0x8000, scoped, tag = 'input window, operand 0, single buffered']
    #allocation4 [shape = 's32[1]{0}', space=sflag, size = 0x4, scoped, tag = 'scoped memory for tpu_custom_call.1']
    #allocation5 [shape = 's32[1]{0}', space=sflag, size = 0x4, scoped, tag = 'scoped memory for tpu_custom_call.1']
    #allocation6 [shape = 'u8[32768]{0}', space=vmem, size = 0x8000, scoped, tag = 'input window, operand 1, single buffered']
    #allocation7 [shape = 's32[1]{0}', space=sflag, size = 0x4, scoped, tag = 'scoped memory for tpu_custom_call.1']
    #allocation8 [shape = 'u8[16384]{0}', space=vmem, size = 0x4000, scoped, tag = 'output window, operand 0, single buffered']
    %8 = vsyncpa [#allocation4], 0
    %9 = vsyncpa [#allocation7], 0
    %10 = vsyncpa [#allocation5], 0
    // Predicated region
    $region2: #{tpu_custom_call.1} parent=1 // pred_check
      _
    $region3: #{tpu_custom_call.1} parent=1 // pred_check_branch
      %12 = sbr.rel (0) target = $region5
    $region4: #{tpu_custom_call.1} parent=1 // pred_region
      %s14 = ssub.s32 1024, 1024
      %15 = vsyncadd [#allocation4], %s14
      %s16 = sshll.u32 [#allocation3], 4
      %s17 = int_to_ptr.vmem [resolvable:$true] %s16
      %22 = dma.hbm_to_vmem [thread:$0]  %s0, 1024, %s17, [#allocation4], 256, 256, 16
    $region5: #{tpu_custom_call.1} parent=1 // pred_fallthru
      _
    // Predicated region
    $region6: #{tpu_custom_call.1} parent=1 // pred_check
      _
    $region7: #{tpu_custom_call.1} parent=1 // pred_check_branch
      %24 = sbr.rel (0) target = $region9
    $region8: #{tpu_custom_call.1} parent=1 // pred_region
      %s26 = ssub.s32 1024, 1024
      %27 = vsyncadd [#allocation7], %s26
      %s28 = sshll.u32 [#allocation6], 4
      %s29 = int_to_ptr.vmem [resolvable:$true] %s28
      %34 = dma.hbm_to_vmem [thread:$0]  %s1, 1024, %s29, [#allocation7], 64, 64, 4
    $region9: #{tpu_custom_call.1} parent=1 // pred_fallthru
      _
    // Predicated region
    $region10: #{tpu_custom_call.1} parent=1 // pred_check
      _
    $region11: #{tpu_custom_call.1} parent=1 // pred_check_branch
      %36 = sbr.rel (0) target = $region13
    $region12: #{tpu_custom_call.1} parent=1 // pred_region
      _
    $region13: #{tpu_custom_call.1} parent=1 // pred_fallthru
      _
    // Predicated region
    $region14: #{tpu_custom_call.1} parent=1 // pred_check
      _
    $region15: #{tpu_custom_call.1} parent=1 // pred_check_branch
      %38 = sbr.rel (0) target = $region17
    $region16: #{tpu_custom_call.1} parent=1 // pred_region
      %39 = dma.done [#allocation4], 1024
    $region17: #{tpu_custom_call.1} parent=1 // pred_fallthru
      _
    // Predicated region
    $region18: #{tpu_custom_call.1} parent=1 // pred_check
      _
    $region19: #{tpu_custom_call.1} parent=1 // pred_check_branch
      %41 = sbr.rel (0) target = $region21
    $region20: #{tpu_custom_call.1} parent=1 // pred_region
      %42 = dma.done [#allocation7], 1024
    $region21: #{tpu_custom_call.1} parent=1 // pred_fallthru
      _
    %p44 = scmp.eq.s32.totalorder 0, 0
    // Predicated region
    $region22: #{tpu_custom_call.1} parent=1 // pred_check
      %p45 = pneg %p44
    $region23: #{tpu_custom_call.1} parent=1 // pred_check_branch
      %47 = sbr.rel (%p45) target = $region25
    $region24: #{tpu_custom_call.1} parent=1 // pred_region
      %v48 = vld [vmem:[#allocation3] sm:$0xff]
      %v49 = vld [vmem:[#allocation3 + $0x8] sm:$0xff]
      %v50 = vld [vmem:[#allocation3 + $0x10] sm:$0xff]
      %v51 = vld [vmem:[#allocation3 + $0x18] sm:$0xff]
      %v52 = vld [vmem:[#allocation3 + $0x20] sm:$0xff]
      %v53 = vld [vmem:[#allocation3 + $0x28] sm:$0xff]
      %v54 = vld [vmem:[#allocation3 + $0x30] sm:$0xff]
      %v55 = vld [vmem:[#allocation3 + $0x38] sm:$0xff]
      %v56 = vunpack.c.l.bf16 %v48
      %v57 = vunpack.c.h.bf16 %v48
      %v58 = vunpack.c.l.bf16 %v49
      %v59 = vunpack.c.h.bf16 %v49
      %v60 = vunpack.c.l.bf16 %v50
      %v61 = vunpack.c.h.bf16 %v50
      %v62 = vunpack.c.l.bf16 %v51
      %v63 = vunpack.c.h.bf16 %v51
      %v64 = vunpack.c.l.bf16 %v52
      %v65 = vunpack.c.h.bf16 %v52
      %v66 = vunpack.c.l.bf16 %v53
      %v67 = vunpack.c.h.bf16 %v53
      %v68 = vunpack.c.l.bf16 %v54
      %v69 = vunpack.c.h.bf16 %v54
      %v70 = vunpack.c.l.bf16 %v55
      %v71 = vunpack.c.h.bf16 %v55
      %v72 = vadd.f32 %v56, %v57
      %v73 = vadd.f32 %v60, %v61
      %v74 = vadd.f32 %v64, %v65
      %v75 = vadd.f32 %v68, %v69
      %v76 = vadd.f32 %v72, %v58
      %v77 = vadd.f32 %v73, %v62
      %v78 = vadd.f32 %v74, %v66
      %v79 = vadd.f32 %v75, %v70
      %v80 = vadd.f32 %v76, %v59
      %v81 = vadd.f32 %v77, %v63
      %v82 = vadd.f32 %v78, %v67
      %v83 = vadd.f32 %v79, %v71
      %v84 = vrot.slane %v80, 1
      %v85 = vrot.slane %v81, 1
      %v86 = vrot.slane %v82, 1
      %v87 = vrot.slane %v83, 1
      %v88 = vlaneseq
      %v89 = vshrl.u32 %v88, 7
      %vm90 = vcmp.lt.s32.totalorder %v89, 7
      %v91 = vsel %vm90, %v86, %v87
      %v92 = vsel %vm90, %v85, %v86
      %v93 = vsel %vm90, %v84, %v85
      %v94 = vsel %vm90, %v87, %v84
      %v95 = vadd.f32 %v80, %v93
      %v96 = vadd.f32 %v81, %v92
      %v97 = vadd.f32 %v82, %v91
      %v98 = vadd.f32 %v83, %v94
      %v99 = vmul.f32 %v95, 0.125
      %v100 = vmul.f32 %v96, 0.125
      %v101 = vmul.f32 %v97, 0.125
      %v102 = vmul.f32 %v98, 0.125
      %v103 = vpack.c.bf16 %v100, %v99
      %v104 = vpack.c.bf16 %v102, %v101
      %105 = vst [vmem:[#allocation2] sm:$0xff] %v103
      %106 = vst [vmem:[#allocation2 + $0x8] sm:$0xff] %v104
    $region25: #{tpu_custom_call.1} parent=1 // pred_fallthru
      _
    %v107 = vld [vmem:[#allocation2] sm:$0xff]
    %v108 = vld [vmem:[#allocation2 + $0x8] sm:$0xff]
    %v109 = vld [vmem:[#allocation6] sm:$0xf]
    %v110 = vld [vmem:[#allocation6 + $0x4] sm:$0xf]
    %v111 = vld [vmem:[#allocation6 + $0x8] sm:$0xf]
    %v112 = vld [vmem:[#allocation6 + $0xc] sm:$0xf]
    %v113 = vld [vmem:[#allocation6 + $0x10] sm:$0xf]
    %v114 = vld [vmem:[#allocation6 + $0x14] sm:$0xf]
    %v115 = vld [vmem:[#allocation6 + $0x18] sm:$0xf]
    %v116 = vld [vmem:[#allocation6 + $0x1c] sm:$0xf]
    %v117 = vld [vmem:[#allocation6 + $0x20] sm:$0xf]
    %v118 = vld [vmem:[#allocation6 + $0x24] sm:$0xf]
    %v119 = vld [vmem:[#allocation6 + $0x28] sm:$0xf]
    %v120 = vld [vmem:[#allocation6 + $0x2c] sm:$0xf]
    %v121 = vld [vmem:[#allocation6 + $0x30] sm:$0xf]
    %v122 = vld [vmem:[#allocation6 + $0x34] sm:$0xf]
    %v123 = vld [vmem:[#allocation6 + $0x38] sm:$0xf]
    %v124 = vld [vmem:[#allocation6 + $0x3c] sm:$0xf]
    %v125 = vld [vmem:[%s2] sm:$0x1]
    %v127 = vlaneseq
    %v128 = vshrl.u32 %v127, 7
    %v129 = vsub.s32 0, %v128
    %v130 = vrot.slane %v125, %v129
    %v148 = vunpack.c.l.b16 %v109
    %v149 = vunpack.c.l.b16 %v110
    %v150 = vunpack.c.l.b16 %v111
    %v151 = vunpack.c.l.b16 %v112
    %v152 = vunpack.c.l.b16 %v113
    %v153 = vunpack.c.l.b16 %v114
    %v154 = vunpack.c.l.b16 %v115
    %v155 = vunpack.c.l.b16 %v116
    %v156 = vunpack.c.l.b16 %v117
    %v157 = vunpack.c.l.b16 %v118
    %v158 = vunpack.c.l.b16 %v119
    %v159 = vunpack.c.l.b16 %v120
    %v160 = vunpack.c.l.b16 %v121
    %v161 = vunpack.c.l.b16 %v122
    %v162 = vunpack.c.l.b16 %v123
    %v163 = vunpack.c.l.b16 %v124
    %v164 = vpack.c.b16 %v149, %v148
    %v165 = vpack.c.b16 %v151, %v150
    %v166 = vpack.c.b16 %v153, %v152
    %v167 = vpack.c.b16 %v155, %v154
    %v168 = vpack.c.b16 %v157, %v156
    %v169 = vpack.c.b16 %v159, %v158
    %v170 = vpack.c.b16 %v161, %v160
    %v171 = vpack.c.b16 %v163, %v162
    %180 = vmatprep.subr.bf16.mxu0 0
    %181 = vmatpush1.bf16.msra.mxu0 %v164
    %182 = vmatprep.subr.bf16.mxu0 0
    %183 = vmatpush1.bf16.msra.mxu0 %v165
    %184 = vmatprep.subr.bf16.mxu0 0
    %185 = vmatpush1.bf16.msra.mxu0 %v166
    %186 = vmatprep.subr.bf16.mxu0 0
    %187 = vmatpush1.bf16.msra.mxu0 %v167
    %188 = vmatprep.subr.bf16.mxu0 0
    %189 = vmatpush1.bf16.msra.mxu0 %v168
    %190 = vmatprep.subr.bf16.mxu0 0
    %191 = vmatpush1.bf16.msra.mxu0 %v169
    %192 = vmatprep.subr.bf16.mxu0 0
    %193 = vmatpush1.bf16.msra.mxu0 %v170
    %194 = vmatprep.subr.bf16.mxu0 0
    %195 = vmatpush1.bf16.msra.mxu0 %v171
    %196 = vmatprep.subr.bf16.mxu0 0
    %197 = vmatpush1.bf16.msra.mxu0 0
    %198 = vmatprep.subr.bf16.mxu0 0
    %199 = vmatpush1.bf16.msra.mxu0 0
    %200 = vmatprep.subr.bf16.mxu0 0
    %201 = vmatpush1.bf16.msra.mxu0 0
    %202 = vmatprep.subr.bf16.mxu0 0
    %203 = vmatpush1.bf16.msra.mxu0 0
    %204 = vmatprep.subr.bf16.mxu0 0
    %205 = vmatpush1.bf16.msra.mxu0 0
    %206 = vmatprep.subr.bf16.mxu0 0
    %207 = vmatpush1.bf16.msra.mxu0 0
    %208 = vmatprep.subr.bf16.mxu0 0
    %209 = vmatpush1.bf16.msra.mxu0 0
    %210 = vmatprep.subr.bf16.mxu0 0
    %211 = vmatpush1.bf16.msra.mxu0 0
    %212 = vmatprep.mubr.bf16.mxu0 0
    %213 = vmatmul.mubr.bf16.gmra.mrb[0].mxu0 %v107
    %v214 = vpop.f32.mrb[0].mxu0
    %v215 = vadd.f32 %v130, %v214
    %v216 = vpop.f32.mrb[0].mxu0
    %v217 = vpop.f32.mrb[0].mxu0
    %v218 = vadd.f32 %v130, %v217
    %v219 = vpop.f32.mrb[0].mxu0
    %220 = vmatprep.mubr.bf16.mxu0 0
    %221 = vmatmul.mubr.bf16.gmra.mrb[0].mxu0 %v108
    %v222 = vpop.f32.mrb[0].mxu0
    %v223 = vadd.f32 %v130, %v222
    %v224 = vpop.f32.mrb[0].mxu0
    %v225 = vpop.f32.mrb[0].mxu0
    %v226 = vadd.f32 %v130, %v225
    %v227 = vpop.f32.mrb[0].mxu0
    %228 = vdwg.mxu0
    %229 = vst [vmem:[#allocation8] sm:$0xff] %v215
    %230 = vst [vmem:[#allocation8 + $0x8] sm:$0xff] %v218
    %231 = vst [vmem:[#allocation8 + $0x10] sm:$0xff] %v223
    %232 = vst [vmem:[#allocation8 + $0x18] sm:$0xff] %v226
    // Predicated region
    $region26: #{tpu_custom_call.1} parent=1 // pred_check
      _
    $region27: #{tpu_custom_call.1} parent=1 // pred_check_branch
      %234 = sbr.rel (0) target = $region29
    $region28: #{tpu_custom_call.1} parent=1 // pred_region
      %s236 = ssub.s32 512, 512
      %237 = vsyncadd [#allocation5], %s236
      %s238 = sshll.u32 [#allocation8], 4
      %s239 = int_to_ptr.vmem [resolvable:$true] %s238
      %244 = dma.vmem_to_hbm [thread:$0]  %s239, 512, %s3, [#allocation5], 128, 128, 8
    $region29: #{tpu_custom_call.1} parent=1 // pred_fallthru
      _
    // Predicated region
    $region30: #{tpu_custom_call.1} parent=1 // pred_check
      _
    $region31: #{tpu_custom_call.1} parent=1 // pred_check_branch
      %246 = sbr.rel (0) target = $region33
    $region32: #{tpu_custom_call.1} parent=1 // pred_region
      %247 = dma.done [#allocation5], 512
    $region33: #{tpu_custom_call.1} parent=1 // pred_fallthru
      _
    %248 = vsyncpa [#allocation4], 1
    %249 = vsyncpa [#allocation7], 1
    %250 = vsyncpa [#allocation5], 1

</llo_original>
